<compile_context>
chip_gen: v5e
topology: v5e:2x2
jax: 0.10.0
libtpu: 0.0.40
codegen_flags: <defaults>
</compile_context>

<pallas_src>
import functools

import jax
import jax.numpy as jnp
from jax import lax
from jax.experimental import pallas as pl
from jax.experimental.pallas import tpu as pltpu


# ----------------------------- tiling helper -------------------------------- #

def _pick_tile(full, pref):
    """Use the MXU-friendly preferred tile if it divides the axis, otherwise
    fall back to the full extent (full-extent blocks always satisfy the
    (8, 128) rule)."""
    return pref if full % pref == 0 else full


# -------------------------------- kernels ----------------------------------- #

def matmul_kernel(x_ref, w_ref, o_ref, acc_ref):
    """o = x @ w^T, tiled; K is grid axis 2 (reduction), f32 accumulation.
    x: (tm, tk), w: (tn, tk) (native nn.Linear layout), o: (tm, tn)."""
    @pl.when(pl.program_id(2) == 0)
    def _init():
        acc_ref[...] = jnp.zeros_like(acc_ref)

    acc_ref[...] += lax.dot_general(
        x_ref[...].astype(jnp.bfloat16),
        w_ref[...].astype(jnp.bfloat16),
        (((1,), (1,)), ((), ())),
        preferred_element_type=jnp.float32,
    )

    @pl.when(pl.program_id(2) == pl.num_programs(2) - 1)
    def _fin():
        o_ref[...] = acc_ref[...].astype(o_ref.dtype)


def matmul_bias_kernel(x_ref, w_ref, b_ref, o_ref, acc_ref):
    """o = x @ w^T + b, tiled; bias added at finalize."""
    @pl.when(pl.program_id(2) == 0)
    def _init():
        acc_ref[...] = jnp.zeros_like(acc_ref)

    acc_ref[...] += lax.dot_general(
        x_ref[...].astype(jnp.bfloat16),
        w_ref[...].astype(jnp.bfloat16),
        (((1,), (1,)), ((), ())),
        preferred_element_type=jnp.float32,
    )

    @pl.when(pl.program_id(2) == pl.num_programs(2) - 1)
    def _fin():
        o_ref[...] = (acc_ref[...] + b_ref[...].astype(jnp.float32)).astype(o_ref.dtype)


def attn_kernel(w_ref, o_ref, *, heads, dim_head, scale):
    """Fused multi-head self-attention (q=k=v=w) for one batch row-slab.

    w_ref / o_ref: (n, heads*dim_head). Heads are split/merged inside the
    kernel so the output store is lane-dense and no HBM transposes are needed.
    """
    wf = w_ref[...].astype(jnp.float32)                    # (n, h*d)
    sqrt_scale = scale ** 0.5
    w_bf = wf.astype(jnp.bfloat16)                         # unscaled, for attn @ w
    ws_bf = (wf * sqrt_scale).astype(jnp.bfloat16)         # pre-scaled, for w @ w^T

    outs = []
    for h in range(heads):                                 # static unroll over heads
        lo = h * dim_head
        wh = w_bf[:, lo:lo + dim_head]                     # (n, d)
        wh_s = ws_bf[:, lo:lo + dim_head]                  # (n, d)

        # dots = scale * (wh @ wh^T): contract last dims, no explicit transpose.
        dots = lax.dot_general(
            wh_s, wh_s, (((1,), (1,)), ((), ())),
            preferred_element_type=jnp.float32,
        )                                                  # (n, n)
        m = jnp.max(dots, axis=-1, keepdims=True)
        e = jnp.exp(dots - m)
        s = jnp.sum(e, axis=-1, keepdims=True)

        # Deferred normalization: (e @ w) * 1/s  -> (n, d) multiply, EUP recip.
        o = lax.dot_general(
            e.astype(jnp.bfloat16), wh, (((1,), (0,)), ((), ())),
            preferred_element_type=jnp.float32,
        )                                                  # (n, d)
        outs.append(o * pl.reciprocal(s, approx=True))

    o_ref[...] = jnp.concatenate(outs, axis=-1).astype(o_ref.dtype)


# -------------------------------- wrappers ----------------------------------- #

def pallas_linear(x2d, w, *, tm=256, tn=256, tk=512):
    """x2d: (M, K), w: (N, K) nn.Linear layout -> (M, N)."""
    M, K = x2d.shape
    N, K2 = w.shape
    assert K == K2
    tm, tn, tk = _pick_tile(M, tm), _pick_tile(N, tn), _pick_tile(K, tk)
    return pl.pallas_call(
        matmul_kernel,
        out_shape=jax.ShapeDtypeStruct((M, N), x2d.dtype),
        grid=(M // tm, N // tn, K // tk),
        in_specs=[
            pl.BlockSpec((tm, tk), lambda i, j, k: (i, k)),
            pl.BlockSpec((tn, tk), lambda i, j, k: (j, k)),
        ],
        out_specs=pl.BlockSpec((tm, tn), lambda i, j, k: (i, j)),
        scratch_shapes=[pltpu.VMEM((tm, tn), jnp.float32)],
        compiler_params=pltpu.CompilerParams(
            dimension_semantics=("parallel", "parallel", "arbitrary"),
        ),
    )(x2d, w)


def pallas_linear_bias(x2d, w, bias, *, tm=256, tn=256, tk=512):
    """x2d: (M, K), w: (N, K), bias: (N,) -> (M, N)."""
    M, K = x2d.shape
    N, K2 = w.shape
    assert K == K2
    tm, tn, tk = _pick_tile(M, tm), _pick_tile(N, tn), _pick_tile(K, tk)
    b2d = bias.reshape(1, N)
    return pl.pallas_call(
        matmul_bias_kernel,
        out_shape=jax.ShapeDtypeStruct((M, N), x2d.dtype),
        grid=(M // tm, N // tn, K // tk),
        in_specs=[
            pl.BlockSpec((tm, tk), lambda i, j, k: (i, k)),
            pl.BlockSpec((tn, tk), lambda i, j, k: (j, k)),
            pl.BlockSpec((1, tn), lambda i, j, k: (0, j)),
        ],
        out_specs=pl.BlockSpec((tm, tn), lambda i, j, k: (i, j)),
        scratch_shapes=[pltpu.VMEM((tm, tn), jnp.float32)],
        compiler_params=pltpu.CompilerParams(
            dimension_semantics=("parallel", "parallel", "arbitrary"),
        ),
    )(x2d, w, b2d)


def pallas_self_attn(qkv_bnf, heads, dim_head, scale):
    """qkv_bnf: (b, n, heads*dim_head) -> same shape, attention applied per head."""
    b, n, inner_dim = qkv_bnf.shape
    kern = functools.partial(attn_kernel, heads=heads, dim_head=dim_head, scale=scale)
    return pl.pallas_call(
        kern,
        out_shape=jax.ShapeDtypeStruct((b, n, inner_dim), qkv_bnf.dtype),
        grid=(b,),
        in_specs=[pl.BlockSpec((None, n, inner_dim), lambda i: (i, 0, 0))],
        out_specs=pl.BlockSpec((None, n, inner_dim), lambda i: (i, 0, 0)),
        compiler_params=pltpu.CompilerParams(dimension_semantics=("parallel",)),
    )(qkv_bnf)


def attention_forward(x, params, heads):
    """CRATE Attention forward. x: (b, n, dim) float32."""
    w_qkv = params["w_qkv"]      # (inner_dim, dim)   — PyTorch Linear weight layout
    w_out = params["w_out"]      # (dim, inner_dim)
    b_out = params["b_out"]      # (dim,)

    b, n, dim = x.shape
    inner_dim = w_qkv.shape[0]
    d = inner_dim // heads
    scale = float(d) ** -0.5

    # qkv projection (no bias):  (b*n, dim) x (inner_dim, dim)^T
    x2d = x.reshape(b * n, dim)
    qkv = pallas_linear(x2d, w_qkv)                        # (b*n, inner_dim)

    # Fused per-batch multi-head attention; heads handled in-kernel, so only a
    # free reshape here (no HBM transposes).
    qkv = qkv.reshape(b, n, inner_dim)
    out = pallas_self_attn(qkv, heads, d, scale)           # (b, n, inner_dim)

    # to_out: Linear(inner_dim, dim) with bias; Dropout(0.0) == identity.
    out2d = out.reshape(b * n, inner_dim)
    y = pallas_linear_bias(out2d, w_out, b_out)            # (b*n, dim)
    return y.reshape(b, n, dim)


# --------------------------- pure-JAX reference ------------------------------ #

def attention_ref(x, params, heads):
    w_qkv, w_out, b_out = params["w_qkv"], params["w_out"], params["b_out"]
    b, n, dim = x.shape
    inner_dim = w_qkv.shape[0]
    d = inner_dim // heads
    scale = float(d) ** -0.5

    qkv = x @ w_qkv.T
    w = qkv.reshape(b, n, heads, d).transpose(0, 2, 1, 3)
    dots = jnp.einsum("bhnd,bhmd->bhnm", w, w) * scale
    attn = jax.nn.softmax(dots, axis=-1)
    out = jnp.einsum("bhnm,bhmd->bhnd", attn, w)
    out = out.transpose(0, 2, 1, 3).reshape(b, n, inner_dim)
    return out @ w_out.T + b_out


# ---------------------------------- main ------------------------------------- #

if __name__ == "__main__":
    # Small shapes: batch=2, seq=8, dim=32, heads=4, dim_head=8 -> inner_dim=32
    batch, seq, dim = 2, 8, 32
    heads, dim_head = 4, 8
    inner_dim = heads * dim_head

    key = jax.random.PRNGKey(0)
    k_x, k_qkv, k_out_w, k_out_b = jax.random.split(key, 4)

    x = jax.random.normal(k_x, (batch, seq, dim), dtype=jnp.float32)
    params = {
        # deterministic synthetic weights (shapes match nn.Linear in __init__)
        "w_qkv": jax.random.normal(k_qkv, (inner_dim, dim), dtype=jnp.float32) * 0.05,
        "w_out": jax.random.normal(k_out_w, (dim, inner_dim), dtype=jnp.float32) * 0.05,
        "b_out": jax.random.normal(k_out_b, (dim,), dtype=jnp.float32) * 0.01,
    }

    y = attention_forward(x, params, heads)
    y = jax.block_until_ready(y)

    y_ref = attention_ref(x, params, heads)
    # bf16 MXU operands + approx reciprocal -> relaxed tolerance vs f32 reference.
    assert jnp.allclose(y, y_ref, atol=2e-2, rtol=2e-2), "mismatch vs reference"

    print("KERNEL_OK")
</pallas_src>

<mosaic_0001>
module attributes {stable_mosaic.version = 11 : i64} {
  func.func @matmul_kernel(%arg0: i32, %arg1: i32, %arg2: i32, %arg3: memref<16x32xf32, #tpu.memory_space<vmem>>, %arg4: memref<32x32xf32, #tpu.memory_space<vmem>>, %arg5: memref<16x32xf32, #tpu.memory_space<vmem>>, %arg6: memref<16x32xf32, #tpu.memory_space<vmem>>) attributes {dimension_semantics = [#tpu.dimension_semantics<parallel>, #tpu.dimension_semantics<parallel>, #tpu.dimension_semantics<arbitrary>], iteration_bounds = array<i64: 1, 1, 1>, scalar_prefetch = 0 : i64, scratch_operands = 1 : i64, tpu.core_type = #tpu.core_type<tc>, window_params = [{transform_indices = @transform_0, window_bounds = array<i64: 16, 32>}, {transform_indices = @transform_1, window_bounds = array<i64: 32, 32>}, {transform_indices = @transform_2, window_bounds = array<i64: 16, 32>}]} {
    %c0_i32 = arith.constant 0 : i32
    %0 = arith.cmpi eq, %arg2, %c0_i32 : i32
    %1 = arith.extui %0 : i1 to i32
    %c0_i32_0 = arith.constant 0 : i32
    %2 = arith.cmpi ne, %1, %c0_i32_0 : i32
    scf.if %2 {
      %cst_10 = arith.constant 0.000000e+00 : f32
      %14 = vector.broadcast %cst_10 : f32 to vector<16x32xf32>
      %c0_11 = arith.constant 0 : index
      %c0_12 = arith.constant 0 : index
      %15 = vector.load %arg6[%c0_11, %c0_12] : memref<16x32xf32, #tpu.memory_space<vmem>>, vector<16x32xf32>
      tpu.vector_store %arg6[%c0_11, %c0_12], %14 {strides = array<i32>} : memref<16x32xf32, #tpu.memory_space<vmem>>, vector<16x32xf32>,
    } else {
    }
    %c0 = arith.constant 0 : index
    %c0_1 = arith.constant 0 : index
    %3 = vector.load %arg6[%c0, %c0_1] : memref<16x32xf32, #tpu.memory_space<vmem>>, vector<16x32xf32>
    %c0_2 = arith.constant 0 : index
    %c0_3 = arith.constant 0 : index
    %4 = vector.load %arg3[%c0_2, %c0_3] : memref<16x32xf32, #tpu.memory_space<vmem>>, vector<16x32xf32>
    %5 = arith.truncf %4 : vector<16x32xf32> to vector<16x32xbf16>
    %c0_4 = arith.constant 0 : index
    %c0_5 = arith.constant 0 : index
    %6 = vector.load %arg4[%c0_4, %c0_5] : memref<32x32xf32, #tpu.memory_space<vmem>>, vector<32x32xf32>
    %7 = arith.truncf %6 : vector<32x32xf32> to vector<32x32xbf16>
    %cst = arith.constant dense<0.000000e+00> : vector<16x32xf32>
    %8 = tpu.matmul %5, %7, %cst {dimension_numbers = #tpu.dot_dimension_numbers<[1], [1], [0], [0], [0, 0, 1, 0], [], []>} : vector<16x32xbf16>, vector<32x32xbf16>, vector<16x32xf32> -> vector<16x32xf32>
    %9 = arith.addf %3, %8 : vector<16x32xf32>
    %c0_6 = arith.constant 0 : index
    %c0_7 = arith.constant 0 : index
    %10 = vector.load %arg6[%c0_6, %c0_7] : memref<16x32xf32, #tpu.memory_space<vmem>>, vector<16x32xf32>
    tpu.vector_store %arg6[%c0_6, %c0_7], %9 {strides = array<i32>} : memref<16x32xf32, #tpu.memory_space<vmem>>, vector<16x32xf32>,
    %c0_i32_8 = arith.constant 0 : i32
    %11 = arith.cmpi eq, %arg2, %c0_i32_8 : i32
    %12 = arith.extui %11 : i1 to i32
    %c0_i32_9 = arith.constant 0 : i32
    %13 = arith.cmpi ne, %12, %c0_i32_9 : i32
    scf.if %13 {
      %c0_10 = arith.constant 0 : index
      %c0_11 = arith.constant 0 : index
      %14 = vector.load %arg6[%c0_10, %c0_11] : memref<16x32xf32, #tpu.memory_space<vmem>>, vector<16x32xf32>
      %c0_12 = arith.constant 0 : index
      %c0_13 = arith.constant 0 : index
      %15 = vector.load %arg5[%c0_12, %c0_13] : memref<16x32xf32, #tpu.memory_space<vmem>>, vector<16x32xf32>
      tpu.vector_store %arg5[%c0_12, %c0_13], %14 {strides = array<i32>} : memref<16x32xf32, #tpu.memory_space<vmem>>, vector<16x32xf32>,
    } else {
    }
    return
  }
  func.func @transform_0(%arg0: i32, %arg1: i32, %arg2: i32) -> (i32, i32) {
    %c0_i32 = arith.constant 0 : i32
    return %arg0, %arg2 : i32, i32
  }
  func.func @transform_1(%arg0: i32, %arg1: i32, %arg2: i32) -> (i32, i32) {
    %c0_i32 = arith.constant 0 : i32
    return %arg1, %arg2 : i32, i32
  }
  func.func @transform_2(%arg0: i32, %arg1: i32, %arg2: i32) -> (i32, i32) {
    %c0_i32 = arith.constant 0 : i32
    return %arg0, %arg1 : i32, i32
  }
}

</mosaic_0001>

<llo_original>
// kernel: tpu_custom_call.1
$region0: #{tpu_custom_call.1}
  #allocation0 [shape = 'u32[]', space=smem, size = 0x4, offset = 0x4, fixed_abs, tag = 'smem constant byte address 0x4 - core index']
  #allocation1 [shape = 'u32[72,128]{1,0:T(1,128)}', space=vmem, size = 0x9000, scoped, tag = 'internal scratch']
  #allocation2 [shape = 'f32[16,32]{1,0:T(8,128)}', space=vmem, size = 0x2000, scoped, tag = 'scratch operand']
  %s0 = inlined_call_operand.hbm [shape: f32[16,32], index: 0, kind: input, shape index: {}]
  %s1 = inlined_call_operand.hbm [shape: f32[32,32], index: 1, kind: input, shape index: {}]
  %s2 = inlined_call_operand.hbm [shape: f32[16,32], index: 2, kind: output, shape index: {}]
  %s3 = sld [smem:[#allocation0]]
  $region34: #{tpu_custom_call.1} parent=0
    _
  %s5 = ssub.s32 1, %s3
  %s6 = scalar_select 0, %s5, %s3
  $region1: #{tpu_custom_call.1} parent=0
    #allocation3 [shape = 'u8[8192]{0}', space=vmem, size = 0x2000, scoped, tag = 'input window, operand 0, single buffered']
    #allocation4 [shape = 's32[1]{0}', space=sflag, size = 0x4, scoped, tag = 'scoped memory for tpu_custom_call.1']
    #allocation5 [shape = 's32[1]{0}', space=sflag, size = 0x4, scoped, tag = 'scoped memory for tpu_custom_call.1']
    #allocation6 [shape = 'u8[16384]{0}', space=vmem, size = 0x4000, scoped, tag = 'input window, operand 1, single buffered']
    #allocation7 [shape = 's32[1]{0}', space=sflag, size = 0x4, scoped, tag = 'scoped memory for tpu_custom_call.1']
    #allocation8 [shape = 'u8[8192]{0}', space=vmem, size = 0x2000, scoped, tag = 'output window, operand 0, single buffered']
    %7 = vsyncpa [#allocation4], 0
    %8 = vsyncpa [#allocation7], 0
    %9 = vsyncpa [#allocation5], 0
    // Predicated region
    $region2: #{tpu_custom_call.1} parent=1 // pred_check
      _
    $region3: #{tpu_custom_call.1} parent=1 // pred_check_branch
      %11 = sbr.rel (0) target = $region5
    $region4: #{tpu_custom_call.1} parent=1 // pred_region
      %13 = vsyncadd [#allocation4], 0
      %s14 = sshll.u32 %s0, 4
      %s15 = int_to_ptr.hbm [resolvable:$true] %s14
      %s16 = sshll.u32 [#allocation3], 4
      %s17 = int_to_ptr.vmem [resolvable:$true] %s16
      %22 = dma.hbm_to_vmem [thread:$0]  %s15, 256, %s17, [#allocation4], 128, 128, 8
    $region5: #{tpu_custom_call.1} parent=1 // pred_fallthru
      _
    // Predicated region
    $region6: #{tpu_custom_call.1} parent=1 // pred_check
      _
    $region7: #{tpu_custom_call.1} parent=1 // pred_check_branch
      %24 = sbr.rel (0) target = $region9
    $region8: #{tpu_custom_call.1} parent=1 // pred_region
      %26 = vsyncadd [#allocation7], 0
      %s27 = sshll.u32 %s1, 4
      %s28 = int_to_ptr.hbm [resolvable:$true] %s27
      %s29 = sshll.u32 [#allocation6], 4
      %s30 = int_to_ptr.vmem [resolvable:$true] %s29
      %35 = dma.hbm_to_vmem [thread:$0]  %s28, 512, %s30, [#allocation7], 128, 128, 8
    $region9: #{tpu_custom_call.1} parent=1 // pred_fallthru
      _
    // Predicated region
    $region10: #{tpu_custom_call.1} parent=1 // pred_check
      _
    $region11: #{tpu_custom_call.1} parent=1 // pred_check_branch
      %37 = sbr.rel (0) target = $region13
    $region12: #{tpu_custom_call.1} parent=1 // pred_region
      %39 = dma.done [#allocation4], 256
    $region13: #{tpu_custom_call.1} parent=1 // pred_fallthru
      _
    // Predicated region
    $region14: #{tpu_custom_call.1} parent=1 // pred_check
      _
    $region15: #{tpu_custom_call.1} parent=1 // pred_check_branch
      %41 = sbr.rel (0) target = $region17
    $region16: #{tpu_custom_call.1} parent=1 // pred_region
      %43 = dma.done [#allocation7], 512
    $region17: #{tpu_custom_call.1} parent=1 // pred_fallthru
      _
    %p45 = scmp.eq.s32.totalorder 0, 0
    // Predicated region
    $region18: #{tpu_custom_call.1} parent=1 // pred_check
      %p46 = pneg %p45
    $region19: #{tpu_custom_call.1} parent=1 // pred_check_branch
      %48 = sbr.rel (%p46) target = $region21
    $region20: #{tpu_custom_call.1} parent=1 // pred_region
      %vm49 = vcmask 261120
      %50 = vst.msk [vmem:[#allocation2] sm:$0xff] %vm49, 0.0
      %51 = vst.msk [vmem:[#allocation2 + $0x8] sm:$0xff] %vm49, 0.0
    $region21: #{tpu_custom_call.1} parent=1 // pred_fallthru
      _
    %v52 = vld [vmem:[#allocation2] sm:$0xff]
    %v53 = vld [vmem:[#allocation2 + $0x8] sm:$0xff]
    %v54 = vld [vmem:[#allocation3] sm:$0xff]
    %v55 = vld [vmem:[#allocation3 + $0x8] sm:$0xff]
    %v56 = vpack.c.bf16 %v55, %v54
    %v57 = vld [vmem:[#allocation6] sm:$0xff]
    %v58 = vld [vmem:[#allocation6 + $0x8] sm:$0xff]
    %v59 = vld [vmem:[#allocation6 + $0x10] sm:$0xff]
    %v60 = vld [vmem:[#allocation6 + $0x18] sm:$0xff]
    %v61 = vpack.c.bf16 %v58, %v57
    %v62 = vpack.c.bf16 %v60, %v59
    %vm63 = vcmask 261120
    %v65 = vsel %vm63, %v56, 0
    %v68 = vsel %vm63, %v61, 0
    %v71 = vsel %vm63, %v62, 0
    %73 = vmatpush.bf16.xpose.msra.mxu0 0
    %74 = vmatpush.bf16.xpose.msra.mxu0 0
    %75 = vmatpush.bf16.xpose.msra.mxu0 0
    %76 = vmatpush.bf16.xpose.msra.mxu0 0
    %77 = vmatpush.bf16.xpose.msra.mxu0 0
    %78 = vmatpush.bf16.xpose.msra.mxu0 0
    %79 = vmatpush.bf16.xpose.msra.mxu0 %v71
    %80 = vmatpush.bf16.xpose.msra.mxu0 %v68
    %81 = vmatmul.bf16.gmra.mxu0 %v65
    %v82 = vpop.f32.mrf.mxu0
    %v83 = vadd.f32 0.0, %v82
    %v84 = vpop.f32.mrf.mxu0
    %v85 = vadd.f32 0.0, %v84
    %86 = vdwg.mxu0
    %v87 = vadd.f32 %v52, %v83
    %v88 = vadd.f32 %v53, %v85
    %89 = vst.msk [vmem:[#allocation2] sm:$0xff] %vm63, %v87
    %90 = vst.msk [vmem:[#allocation2 + $0x8] sm:$0xff] %vm63, %v88
    // Predicated region
    $region22: #{tpu_custom_call.1} parent=1 // pred_check
      %p91 = pneg %p45
    $region23: #{tpu_custom_call.1} parent=1 // pred_check_branch
      %93 = sbr.rel (%p91) target = $region25
    $region24: #{tpu_custom_call.1} parent=1 // pred_region
      %v94 = vld [vmem:[#allocation2] sm:$0xff]
      %v95 = vld [vmem:[#allocation2 + $0x8] sm:$0xff]
      %96 = vst.msk [vmem:[#allocation8] sm:$0xff] %vm63, %v94
      %97 = vst.msk [vmem:[#allocation8 + $0x8] sm:$0xff] %vm63, %v95
    $region25: #{tpu_custom_call.1} parent=1 // pred_fallthru
      _
    // Predicated region
    $region26: #{tpu_custom_call.1} parent=1 // pred_check
      _
    $region27: #{tpu_custom_call.1} parent=1 // pred_check_branch
      %99 = sbr.rel (0) target = $region29
    $region28: #{tpu_custom_call.1} parent=1 // pred_region
      %101 = vsyncadd [#allocation5], 0
      %s102 = sshll.u32 [#allocation8], 4
      %s103 = int_to_ptr.vmem [resolvable:$true] %s102
      %s104 = sshll.u32 %s2, 4
      %s105 = int_to_ptr.hbm [resolvable:$true] %s104
      %110 = dma.vmem_to_hbm [thread:$0]  %s103, 256, %s105, [#allocation5], 128, 128, 8
    $region29: #{tpu_custom_call.1} parent=1 // pred_fallthru
      _
    // Predicated region
    $region30: #{tpu_custom_call.1} parent=1 // pred_check
      _
    $region31: #{tpu_custom_call.1} parent=1 // pred_check_branch
      %112 = sbr.rel (0) target = $region33
    $region32: #{tpu_custom_call.1} parent=1 // pred_region
      %114 = dma.done [#allocation5], 256
    $region33: #{tpu_custom_call.1} parent=1 // pred_fallthru
      _
    %115 = vsyncpa [#allocation4], 1
    %116 = vsyncpa [#allocation7], 1
    %117 = vsyncpa [#allocation5], 1

</llo_original>
